<compile_context>
chip_gen: v7x
topology: tpu7x:2x2x1
jax: 0.10.0
libtpu: 0.0.40
codegen_flags: <defaults>
</compile_context>

<pallas_src>
import functools

import jax
import jax.numpy as jnp
from jax import lax
from jax.experimental import pallas as pl
from jax.experimental.pallas import tpu as pltpu


def _round_up(x, m):
    return (x + m - 1) // m * m


def _rnn_seq_kernel(x_ref, h0_ref, wx_ref, wh_ref, b_ref, out_ref, h_ref, *, HP):
    """One grid step == one RNN cell step.

    x_ref  : [Bp, I]   this timestep's input (pipelined along the T grid axis)
    h0_ref : [Bp, HP]  initial hidden (VMEM-resident, constant index_map)
    wx_ref : [I,  P]   fused weights for the input rows   (resident)
    wh_ref : [HP, P]   fused weights for the hidden rows  (resident)
    b_ref  : [1,  P]   fused f32 bias (padded logit lanes hold -1e30)
    out_ref: [Bp, OP]  this step's log-softmax            (streamed out)
    h_ref  : [Bp, HP]  carried hidden state (constant-index output accumulator)

    Fused slab layout (P = HP + OP, both 128-aligned):
      cols [0, HP)  -> i2h pre-activation (relu)
      cols [HP, P)  -> i2o logits (log-softmax)
    """
    t = pl.program_id(0)

    @pl.when(t == 0)
    def _():
        h_ref[...] = h0_ref[...]

    # Algebraic split of the (x, h) concat: two MXU pushes sharing one f32
    # accumulator -- no HBM concat, weights never leave VMEM.
    acc = jnp.dot(x_ref[...], wx_ref[...], preferred_element_type=jnp.float32)
    acc = acc + jnp.dot(h_ref[...], wh_ref[...],
                        preferred_element_type=jnp.float32)
    acc = acc + b_ref[...]

    hidden = jnp.maximum(acc[:, :HP], 0.0)        # lane-aligned slice @ 0
    logits = acc[:, HP:]                          # lane-aligned slice @ HP

    # Max-stabilized log-softmax in f32. Padded logit lanes carry a -1e30 bias
    # so exp() underflows to exactly 0 -- no iota/where masking needed.
    m = jnp.max(logits, axis=1, keepdims=True)
    e = jnp.exp(logits - m)
    lse = jnp.log(jnp.sum(e, axis=1, keepdims=True))

    h_ref[...] = hidden.astype(h_ref.dtype)
    out_ref[...] = (logits - m - lse).astype(out_ref.dtype)


def pack_rnn_params(w_ih, b_ih, w_io, b_io, input_size, *,
                    compute_dtype=jnp.float32):
    """Pack both Linear layers into MXU-friendly slabs.  Call ONCE at
    parameter-init time (hoisted out of the per-step path).

    Returns (wx [I,P], wh [HP,P], bias [1,P]) with HP = round_up(H,128),
    OP = round_up(O,128), P = HP + OP.  On v6e/v7x pass
    compute_dtype=jnp.bfloat16 to halve resident-weight VMEM and run the MXU
    at native bf16 throughput; the accumulator/bias/softmax stay in f32.
    """
    H = w_ih.shape[0]
    O = w_io.shape[0]
    I = input_size
    HP = _round_up(H, 128)
    OP = _round_up(max(O, 1), 128)
    P = HP + OP

    w = jnp.zeros((I + H, P), compute_dtype)
    w = w.at[:, :H].set(w_ih.T.astype(compute_dtype))
    w = w.at[:, HP:HP + O].set(w_io.T.astype(compute_dtype))
    wx = w[:I]                                                     # [I,  P]
    wh = jnp.zeros((HP, P), compute_dtype).at[:H, :].set(w[I:])    # [HP, P]

    b = jnp.zeros((1, P), jnp.float32)
    b = b.at[0, :H].set(b_ih.astype(jnp.float32))
    b = b.at[0, HP:HP + O].set(b_io.astype(jnp.float32))
    b = b.at[0, HP + O:].set(-1e30)          # bake softmax mask into the bias
    return wx, wh, b


def _rnn_sequence_impl(x_seq, h0, wx, wh, b, output_size):
    T, B, I = x_seq.shape
    H = h0.shape[1]
    O = output_size
    HP = wh.shape[0]
    P = wx.shape[1]
    OP = P - HP
    cdt = wx.dtype

    # Pad batch to the native sublane tile so loads/stores are unmasked.
    sub = 16 if cdt == jnp.bfloat16 else 8
    Bp = _round_up(B, sub)

    x_p = jnp.zeros((T, Bp, I), cdt).at[:, :B, :].set(x_seq.astype(cdt))
    h_p = jnp.zeros((Bp, HP), cdt).at[:B, :H].set(h0.astype(cdt))

    const = lambda t: (0, 0)
    cost = pl.CostEstimate(
        flops=T * (2 * Bp * (I + HP) * P + 6 * Bp * P),
        transcendentals=T * Bp * (OP + 1),
        bytes_accessed=(4 * (T * Bp * (I + OP) + Bp * HP)
                        + wx.size * wx.dtype.itemsize
                        + wh.size * wh.dtype.itemsize + 4 * P),
    )

    out_seq, h_last = pl.pallas_call(
        functools.partial(_rnn_seq_kernel, HP=HP),
        out_shape=(jax.ShapeDtypeStruct((T, Bp, OP), jnp.float32),
                   jax.ShapeDtypeStruct((Bp, HP), cdt)),
        grid=(T,),
        in_specs=[
            pl.BlockSpec((None, Bp, I), lambda t: (t, 0, 0)),   # x_t (pipelined)
            pl.BlockSpec((Bp, HP), const),                      # h0    (resident)
            pl.BlockSpec((I, P), const),                        # wx    (resident)
            pl.BlockSpec((HP, P), const),                       # wh    (resident)
            pl.BlockSpec((1, P), const),                        # bias  (resident)
        ],
        out_specs=(
            pl.BlockSpec((None, Bp, OP), lambda t: (t, 0, 0)),  # per-step log-sm
            pl.BlockSpec((Bp, HP), const),                      # carried hidden
        ),
        compiler_params=pltpu.CompilerParams(
            dimension_semantics=("arbitrary",),   # time axis is a true carry
        ),
        cost_estimate=cost,
    )(x_p, h_p, wx, wh, b)

    # Both slices start at row/column 0 -> sublane/lane-aligned free views.
    return out_seq[:, :B, :O], h_last[:B, :H].astype(h0.dtype)


@functools.partial(jax.jit, static_argnames=("output_size",))
def rnn_forward(input_tensor, hidden_tensor, wx, wh, b, *, output_size):
    """One RNN.forward step (matches the PyTorch module's forward)."""
    out_seq, hidden = _rnn_sequence_impl(input_tensor[None], hidden_tensor,
                                         wx, wh, b, output_size)
    return out_seq[0], hidden


@functools.partial(jax.jit, static_argnames=("output_size",))
def rnn_sequence(x_seq, h0, wx, wh, b, *, output_size):
    """Drive T RNN.forward steps inside ONE pallas_call (grid=(T,))."""
    return _rnn_sequence_impl(x_seq, h0, wx, wh, b, output_size)


def _reference_step(x, h, w_ih, b_ih, w_io, b_io):
    combined = jnp.concatenate([x, h], axis=1)
    hp = lax.Precision.HIGHEST
    hidden = jnp.maximum(jnp.dot(combined, w_ih.T, precision=hp) + b_ih, 0.0)
    logits = jnp.dot(combined, w_io.T, precision=hp) + b_io
    return jax.nn.log_softmax(logits, axis=1), hidden


if __name__ == "__main__":
    input_size, hidden_size, output_size = 16, 32, 8
    batch, seq_len = 2, 8

    key = jax.random.PRNGKey(0)
    k1, k2, k3, k4, k5 = jax.random.split(key, 5)

    fan_in = input_size + hidden_size
    bound = 1.0 / jnp.sqrt(fan_in)
    w_ih = jax.random.uniform(k1, (hidden_size, fan_in), jnp.float32, -bound, bound)
    b_ih = jax.random.uniform(k2, (hidden_size,), jnp.float32, -bound, bound)
    w_io = jax.random.uniform(k3, (output_size, fan_in), jnp.float32, -bound, bound)
    b_io = jax.random.uniform(k4, (output_size,), jnp.float32, -bound, bound)

    # Pack weights ONCE (hoisted out of the per-call path).
    wx, wh, b = jax.block_until_ready(
        pack_rnn_params(w_ih, b_ih, w_io, b_io, input_size))

    x_seq = jax.random.normal(k5, (seq_len, batch, input_size), jnp.float32)
    h0 = jnp.zeros((batch, hidden_size), jnp.float32)   # init_hidden, batched

    # --- single step (exactly the module's forward) -------------------------
    out1, hid1 = rnn_forward(x_seq[0], h0, wx, wh, b, output_size=output_size)
    jax.block_until_ready((out1, hid1))

    ref_out1, ref_hid1 = _reference_step(x_seq[0], h0, w_ih, b_ih, w_io, b_io)
    assert out1.shape == (batch, output_size) and hid1.shape == (batch, hidden_size)
    assert jnp.allclose(out1, ref_out1, atol=1e-4), "single-step output mismatch"
    assert jnp.allclose(hid1, ref_hid1, atol=1e-4), "single-step hidden mismatch"

    # --- full sequence in one kernel launch ----------------------------------
    out_seq, hid_last = rnn_sequence(x_seq, h0, wx, wh, b,
                                     output_size=output_size)
    jax.block_until_ready((out_seq, hid_last))

    ref_h = h0
    for t in range(seq_len):
        ref_o, ref_h = _reference_step(x_seq[t], ref_h, w_ih, b_ih, w_io, b_io)
        assert jnp.allclose(out_seq[t], ref_o, atol=1e-4), f"seq output mismatch @t={t}"
    assert jnp.allclose(hid_last, ref_h, atol=1e-4), "final hidden mismatch"

    print("KERNEL_OK")
</pallas_src>

<mosaic_0001>
module attributes {stable_mosaic.version = 11 : i64} {
  func.func @_rnn_seq_kernel(%arg0: i32, %arg1: memref<1x8x16xf32, #tpu.memory_space<vmem>>, %arg2: memref<8x128xf32, #tpu.memory_space<vmem>>, %arg3: memref<16x256xf32, #tpu.memory_space<vmem>>, %arg4: memref<128x256xf32, #tpu.memory_space<vmem>>, %arg5: memref<1x256xf32, #tpu.memory_space<vmem>>, %arg6: memref<1x8x128xf32, #tpu.memory_space<vmem>>, %arg7: memref<8x128xf32, #tpu.memory_space<vmem>>) attributes {dimension_semantics = [#tpu.dimension_semantics<arbitrary>], iteration_bounds = array<i64: 1>, scalar_prefetch = 0 : i64, scratch_operands = 0 : i64, tpu.core_type = #tpu.core_type<tc>, window_params = [{transform_indices = @transform_0, window_bounds = array<i64: 1, 8, 16>}, {pipeline_mode = #tpu.pipeline_mode<synchronous>, transform_indices = @transform_1, window_bounds = array<i64: 8, 128>}, {pipeline_mode = #tpu.pipeline_mode<synchronous>, transform_indices = @transform_2, window_bounds = array<i64: 16, 256>}, {pipeline_mode = #tpu.pipeline_mode<synchronous>, transform_indices = @transform_3, window_bounds = array<i64: 128, 256>}, {pipeline_mode = #tpu.pipeline_mode<synchronous>, transform_indices = @transform_4, window_bounds = array<i64: 1, 256>}, {transform_indices = @transform_5, window_bounds = array<i64: 1, 8, 128>}, {pipeline_mode = #tpu.pipeline_mode<synchronous>, transform_indices = @transform_6, window_bounds = array<i64: 8, 128>}]} {
    %c0_i32 = arith.constant 0 : i32
    %0 = arith.cmpi eq, %arg0, %c0_i32 : i32
    %1 = arith.extui %0 : i1 to i32
    %c0_i32_0 = arith.constant 0 : i32
    %2 = arith.cmpi ne, %1, %c0_i32_0 : i32
    scf.if %2 {
      %c0_20 = arith.constant 0 : index
      %c0_21 = arith.constant 0 : index
      %34 = vector.load %arg2[%c0_20, %c0_21] : memref<8x128xf32, #tpu.memory_space<vmem>>, vector<8x128xf32>
      %c0_22 = arith.constant 0 : index
      %c0_23 = arith.constant 0 : index
      %35 = vector.load %arg7[%c0_22, %c0_23] : memref<8x128xf32, #tpu.memory_space<vmem>>, vector<8x128xf32>
      tpu.vector_store %arg7[%c0_22, %c0_23], %34 {strides = array<i32>} : memref<8x128xf32, #tpu.memory_space<vmem>>, vector<8x128xf32>,
    } else {
    }
    %c0 = arith.constant 0 : index
    %c0_1 = arith.constant 0 : index
    %c0_2 = arith.constant 0 : index
    %3 = vector.load %arg1[%c0, %c0_1, %c0_2] : memref<1x8x16xf32, #tpu.memory_space<vmem>>, vector<1x8x16xf32>
    %4 = vector.shape_cast %3 : vector<1x8x16xf32> to vector<8x16xf32>
    %c0_3 = arith.constant 0 : index
    %c0_4 = arith.constant 0 : index
    %5 = vector.load %arg3[%c0_3, %c0_4] : memref<16x256xf32, #tpu.memory_space<vmem>>, vector<16x256xf32>
    %cst = arith.constant dense<0.000000e+00> : vector<8x256xf32>
    %6 = tpu.matmul %4, %5, %cst {dimension_numbers = #tpu.dot_dimension_numbers<[1], [0], [0], [1], [0, 0, 1, 1], [], []>} : vector<8x16xf32>, vector<16x256xf32>, vector<8x256xf32> -> vector<8x256xf32>
    %c0_5 = arith.constant 0 : index
    %c0_6 = arith.constant 0 : index
    %7 = vector.load %arg7[%c0_5, %c0_6] : memref<8x128xf32, #tpu.memory_space<vmem>>, vector<8x128xf32>
    %c0_7 = arith.constant 0 : index
    %c0_8 = arith.constant 0 : index
    %8 = vector.load %arg4[%c0_7, %c0_8] : memref<128x256xf32, #tpu.memory_space<vmem>>, vector<128x256xf32>
    %cst_9 = arith.constant dense<0.000000e+00> : vector<8x256xf32>
    %9 = tpu.matmul %7, %8, %cst_9 {dimension_numbers = #tpu.dot_dimension_numbers<[1], [0], [0], [1], [0, 0, 1, 1], [], []>} : vector<8x128xf32>, vector<128x256xf32>, vector<8x256xf32> -> vector<8x256xf32>
    %10 = arith.addf %6, %9 : vector<8x256xf32>
    %c0_10 = arith.constant 0 : index
    %c0_11 = arith.constant 0 : index
    %11 = vector.load %arg5[%c0_10, %c0_11] : memref<1x256xf32, #tpu.memory_space<vmem>>, vector<1x256xf32>
    %12 = vector.broadcast %11 : vector<1x256xf32> to vector<8x256xf32>
    %13 = arith.addf %10, %12 : vector<8x256xf32>
    %14 = vector.extract_strided_slice %13 {offsets = [0, 0], sizes = [8, 128], strides = [1, 1]} : vector<8x256xf32> to vector<8x128xf32>
    %cst_12 = arith.constant 0.000000e+00 : f32
    %15 = vector.broadcast %cst_12 : f32 to vector<8x128xf32>
    %16 = arith.maximumf %14, %15 : vector<8x128xf32>
    %17 = vector.extract_strided_slice %13 {offsets = [0, 128], sizes = [8, 128], strides = [1, 1]} : vector<8x256xf32> to vector<8x128xf32>
    %cst_13 = arith.constant dense<0xFF800000> : vector<8xf32>
    %18 = vector.multi_reduction <maximumf>, %17, %cst_13 [1] : vector<8x128xf32> to vector<8xf32>
    %19 = vector.shape_cast %18 : vector<8xf32> to vector<8x1xf32>
    %20 = vector.broadcast %19 : vector<8x1xf32> to vector<8x128xf32>
    %21 = arith.subf %17, %20 : vector<8x128xf32>
    %22 = math.exp %21 : vector<8x128xf32>
    %cst_14 = arith.constant dense<0.000000e+00> : vector<8xf32>
    %23 = vector.multi_reduction <add>, %22, %cst_14 [1] : vector<8x128xf32> to vector<8xf32>
    %24 = vector.shape_cast %23 : vector<8xf32> to vector<8x1xf32>
    %25 = math.log %24 : vector<8x1xf32>
    %c0_15 = arith.constant 0 : index
    %c0_16 = arith.constant 0 : index
    %26 = vector.load %arg7[%c0_15, %c0_16] : memref<8x128xf32, #tpu.memory_space<vmem>>, vector<8x128xf32>
    tpu.vector_store %arg7[%c0_15, %c0_16], %16 {strides = array<i32>} : memref<8x128xf32, #tpu.memory_space<vmem>>, vector<8x128xf32>,
    %27 = vector.broadcast %19 : vector<8x1xf32> to vector<8x128xf32>
    %28 = arith.subf %17, %27 : vector<8x128xf32>
    %29 = vector.broadcast %25 : vector<8x1xf32> to vector<8x128xf32>
    %30 = arith.subf %28, %29 : vector<8x128xf32>
    %c0_17 = arith.constant 0 : index
    %c0_18 = arith.constant 0 : index
    %c0_19 = arith.constant 0 : index
    %31 = vector.load %arg6[%c0_17, %c0_18, %c0_19] : memref<1x8x128xf32, #tpu.memory_space<vmem>>, vector<1x8x128xf32>
    %32 = vector.shape_cast %31 : vector<1x8x128xf32> to vector<8x128xf32>
    %33 = vector.shape_cast %30 : vector<8x128xf32> to vector<1x8x128xf32>
    tpu.vector_store %arg6[%c0_17, %c0_18, %c0_19], %33 {strides = array<i32>} : memref<1x8x128xf32, #tpu.memory_space<vmem>>, vector<1x8x128xf32>,
    return
  }
  func.func @transform_0(%arg0: i32) -> (i32, i32, i32) {
    %c0_i32 = arith.constant 0 : i32
    %c0_i32_0 = arith.constant 0 : i32
    %c0_i32_1 = arith.constant 0 : i32
    return %arg0, %c0_i32, %c0_i32_0 : i32, i32, i32
  }
  func.func @transform_1(%arg0: i32) -> (i32, i32) {
    %c0_i32 = arith.constant 0 : i32
    %c0_i32_0 = arith.constant 0 : i32
    %c0_i32_1 = arith.constant 0 : i32
    return %c0_i32, %c0_i32_0 : i32, i32
  }
  func.func @transform_2(%arg0: i32) -> (i32, i32) {
    %c0_i32 = arith.constant 0 : i32
    %c0_i32_0 = arith.constant 0 : i32
    %c0_i32_1 = arith.constant 0 : i32
    return %c0_i32, %c0_i32_0 : i32, i32
  }
  func.func @transform_3(%arg0: i32) -> (i32, i32) {
    %c0_i32 = arith.constant 0 : i32
    %c0_i32_0 = arith.constant 0 : i32
    %c0_i32_1 = arith.constant 0 : i32
    return %c0_i32, %c0_i32_0 : i32, i32
  }
  func.func @transform_4(%arg0: i32) -> (i32, i32) {
    %c0_i32 = arith.constant 0 : i32
    %c0_i32_0 = arith.constant 0 : i32
    %c0_i32_1 = arith.constant 0 : i32
    return %c0_i32, %c0_i32_0 : i32, i32
  }
  func.func @transform_5(%arg0: i32) -> (i32, i32, i32) {
    %c0_i32 = arith.constant 0 : i32
    %c0_i32_0 = arith.constant 0 : i32
    %c0_i32_1 = arith.constant 0 : i32
    return %arg0, %c0_i32, %c0_i32_0 : i32, i32, i32
  }
  func.func @transform_6(%arg0: i32) -> (i32, i32) {
    %c0_i32 = arith.constant 0 : i32
    %c0_i32_0 = arith.constant 0 : i32
    %c0_i32_1 = arith.constant 0 : i32
    return %c0_i32, %c0_i32_0 : i32, i32
  }
}

</mosaic_0001>

<llo_original>
// kernel: rnn_forward.1
$region0: #{rnn_forward.1}
  #allocation0 [shape = 'u32[]', space=smem, size = 0x4, offset = 0x4, fixed_abs, tag = 'smem constant byte address 0x4 - core index']
  #allocation1 [shape = 'u32[144,128]{1,0:T(1,128)}', space=vmem, size = 0x12000, scoped, tag = 'internal scratch']
  %s0 = inlined_call_operand.vmem [shape: f32[1,8,16], index: 0, kind: input, shape index: {}]
  %s1 = inlined_call_operand.vmem [shape: f32[8,128], index: 1, kind: input, shape index: {}]
  %s2 = inlined_call_operand.vmem [shape: f32[16,256], index: 2, kind: input, shape index: {}]
  %s3 = inlined_call_operand.hbm [shape: f32[128,256], index: 3, kind: input, shape index: {}]
  %s4 = inlined_call_operand.vmem [shape: f32[1,256], index: 4, kind: input, shape index: {}]
  %s5 = inlined_call_operand.vmem [shape: f32[1,8,128], index: 5, kind: output, shape index: {0}]
  %s6 = inlined_call_operand.vmem [shape: f32[8,128], index: 6, kind: output, shape index: {1}]
  %7 = xla_tuple %s5, %s6
  %s8 = sld [smem:[#allocation0]]
  $region46: #{rnn_forward.1} parent=0
    _
  %s10 = ssub.s32 1, %s8
  %s11 = scalar_select 0, %s10, %s8
  $region1: #{rnn_forward.1} parent=0
    #allocation2 [shape = 'u8[131072]{0}', space=vmem, size = 0x20000, scoped, tag = 'input window, operand 3, single buffered']
    #allocation3 [shape = 's32[1]{0}', space=sflag, size = 0x4, scoped, tag = 'scoped memory for rnn_forward.1']
    %12 = vsyncpa [#allocation3], 0
    // Predicated region
    $region2: #{rnn_forward.1} parent=1 // pred_check
      _
    $region3: #{rnn_forward.1} parent=1 // pred_check_branch
      %14 = sbr.rel (0) target = $region5
    $region4: #{rnn_forward.1} parent=1 // pred_region
      _
    $region5: #{rnn_forward.1} parent=1 // pred_fallthru
      _
    // Predicated region
    $region6: #{rnn_forward.1} parent=1 // pred_check
      _
    $region7: #{rnn_forward.1} parent=1 // pred_check_branch
      %16 = sbr.rel (0) target = $region9
    $region8: #{rnn_forward.1} parent=1 // pred_region
      _
    $region9: #{rnn_forward.1} parent=1 // pred_fallthru
      _
    // Predicated region
    $region10: #{rnn_forward.1} parent=1 // pred_check
      _
    $region11: #{rnn_forward.1} parent=1 // pred_check_branch
      %18 = sbr.rel (0) target = $region13
    $region12: #{rnn_forward.1} parent=1 // pred_region
      _
    $region13: #{rnn_forward.1} parent=1 // pred_fallthru
      _
    // Predicated region
    $region14: #{rnn_forward.1} parent=1 // pred_check
      _
    $region15: #{rnn_forward.1} parent=1 // pred_check_branch
      %20 = sbr.rel (0) target = $region17
    $region16: #{rnn_forward.1} parent=1 // pred_region
      %s22 = ssub.s32 4096, 4096
      %23 = vsyncadd [#allocation3], %s22
      %s24 = sshll.u32 [#allocation2], 4
      %s25 = int_to_ptr.vmem [resolvable:$true] %s24
      %30 = dma.hbm_to_vmem [thread:$0]  %s3, 4096, %s25, [#allocation3], 256, 256, 16
    $region17: #{rnn_forward.1} parent=1 // pred_fallthru
      _
    // Predicated region
    $region18: #{rnn_forward.1} parent=1 // pred_check
      _
    $region19: #{rnn_forward.1} parent=1 // pred_check_branch
      %32 = sbr.rel (0) target = $region21
    $region20: #{rnn_forward.1} parent=1 // pred_region
      _
    $region21: #{rnn_forward.1} parent=1 // pred_fallthru
      _
    // Predicated region
    $region22: #{rnn_forward.1} parent=1 // pred_check
      _
    $region23: #{rnn_forward.1} parent=1 // pred_check_branch
      %34 = sbr.rel (0) target = $region25
    $region24: #{rnn_forward.1} parent=1 // pred_region
      %35 = dma.done [#allocation3], 4096
    $region25: #{rnn_forward.1} parent=1 // pred_fallthru
      _
    %p36 = scmp.eq.s32.totalorder 0, 0
    // Predicated region
    $region26: #{rnn_forward.1} parent=1 // pred_check
      %p37 = pneg %p36
    $region27: #{rnn_forward.1} parent=1 // pred_check_branch
      %39 = sbr.rel (%p37) target = $region29
    $region28: #{rnn_forward.1} parent=1 // pred_region
      %v40 = vld [vmem:[%s1] sm:$0xff]
      %41 = vst [vmem:[%s6] sm:$0xff] %v40
    $region29: #{rnn_forward.1} parent=1 // pred_fallthru
      _
    %v42 = vld [vmem:[%s0] sm:$0xff]
    %v43 = vld [vmem:[%s2] sm:$0xff]
    %v44 = vld [vmem:[%s2 + $0x8] sm:$0xff]
    %v45 = vld [vmem:[%s2 + $0x10] sm:$0xff]
    %v46 = vld [vmem:[%s2 + $0x18] sm:$0xff]
    %v47 = vld [vmem:[%s6] sm:$0xff]
    %v48 = vld [vmem:[#allocation2] sm:$0xff]
    %v49 = vld [vmem:[#allocation2 + $0x8] sm:$0xff]
    %v50 = vld [vmem:[#allocation2 + $0x10] sm:$0xff]
    %v51 = vld [vmem:[#allocation2 + $0x18] sm:$0xff]
    %v52 = vld [vmem:[#allocation2 + $0x20] sm:$0xff]
    %v53 = vld [vmem:[#allocation2 + $0x28] sm:$0xff]
    %v54 = vld [vmem:[#allocation2 + $0x30] sm:$0xff]
    %v55 = vld [vmem:[#allocation2 + $0x38] sm:$0xff]
    %v56 = vld [vmem:[#allocation2 + $0x40] sm:$0xff]
    %v57 = vld [vmem:[#allocation2 + $0x48] sm:$0xff]
    %v58 = vld [vmem:[#allocation2 + $0x50] sm:$0xff]
    %v59 = vld [vmem:[#allocation2 + $0x58] sm:$0xff]
    %v60 = vld [vmem:[#allocation2 + $0x60] sm:$0xff]
    %v61 = vld [vmem:[#allocation2 + $0x68] sm:$0xff]
    %v62 = vld [vmem:[#allocation2 + $0x70] sm:$0xff]
    %v63 = vld [vmem:[#allocation2 + $0x78] sm:$0xff]
    %v64 = vld [vmem:[#allocation2 + $0x80] sm:$0xff]
    %v65 = vld [vmem:[#allocation2 + $0x88] sm:$0xff]
    %v66 = vld [vmem:[#allocation2 + $0x90] sm:$0xff]
    %v67 = vld [vmem:[#allocation2 + $0x98] sm:$0xff]
    %v68 = vld [vmem:[#allocation2 + $0xa0] sm:$0xff]
    %v69 = vld [vmem:[#allocation2 + $0xa8] sm:$0xff]
    %v70 = vld [vmem:[#allocation2 + $0xb0] sm:$0xff]
    %v71 = vld [vmem:[#allocation2 + $0xb8] sm:$0xff]
    %v72 = vld [vmem:[#allocation2 + $0xc0] sm:$0xff]
    %v73 = vld [vmem:[#allocation2 + $0xc8] sm:$0xff]
    %v74 = vld [vmem:[#allocation2 + $0xd0] sm:$0xff]
    %v75 = vld [vmem:[#allocation2 + $0xd8] sm:$0xff]
    %v76 = vld [vmem:[#allocation2 + $0xe0] sm:$0xff]
    %v77 = vld [vmem:[#allocation2 + $0xe8] sm:$0xff]
    %v78 = vld [vmem:[#allocation2 + $0xf0] sm:$0xff]
    %v79 = vld [vmem:[#allocation2 + $0xf8] sm:$0xff]
    %80 = vmatprep.subr.mxu0 %v49
    %81 = vmatpush1.msra.mxu0 %v48
    %82 = vmatprep.subr.mxu0 %v51
    %83 = vmatpush1.msra.mxu0 %v50
    %84 = vmatprep.subr.mxu0 %v53
    %85 = vmatpush1.msra.mxu0 %v52
    %86 = vmatprep.subr.mxu0 %v55
    %87 = vmatpush1.msra.mxu0 %v54
    %88 = vmatprep.subr.mxu0 %v57
    %89 = vmatpush1.msra.mxu0 %v56
    %90 = vmatprep.subr.mxu0 %v59
    %91 = vmatpush1.msra.mxu0 %v58
    %92 = vmatprep.subr.mxu0 %v61
    %93 = vmatpush1.msra.mxu0 %v60
    %94 = vmatprep.subr.mxu0 %v63
    %95 = vmatpush1.msra.mxu0 %v62
    %96 = vmatprep.subr.mxu0 %v65
    %97 = vmatpush1.msra.mxu0 %v64
    %98 = vmatprep.subr.mxu0 %v67
    %99 = vmatpush1.msra.mxu0 %v66
    %100 = vmatprep.subr.mxu0 %v69
    %101 = vmatpush1.msra.mxu0 %v68
    %102 = vmatprep.subr.mxu0 %v71
    %103 = vmatpush1.msra.mxu0 %v70
    %104 = vmatprep.subr.mxu0 %v73
    %105 = vmatpush1.msra.mxu0 %v72
    %106 = vmatprep.subr.mxu0 %v75
    %107 = vmatpush1.msra.mxu0 %v74
    %108 = vmatprep.subr.mxu0 %v77
    %109 = vmatpush1.msra.mxu0 %v76
    %110 = vmatprep.subr.mxu0 %v79
    %111 = vmatpush1.msra.mxu0 %v78
    %112 = vmatprep.subr.mxu0 0.0
    %113 = vmatpush1.msra.mxu0 0.0
    %114 = vmatprep.subr.mxu0 0.0
    %115 = vmatpush1.msra.mxu0 0.0
    %116 = vmatprep.subr.mxu0 0.0
    %117 = vmatpush1.msra.mxu0 0.0
    %118 = vmatprep.subr.mxu0 0.0
    %119 = vmatpush1.msra.mxu0 0.0
    %120 = vmatprep.subr.mxu0 0.0
    %121 = vmatpush1.msra.mxu0 0.0
    %122 = vmatprep.subr.mxu0 0.0
    %123 = vmatpush1.msra.mxu0 0.0
    %124 = vmatprep.subr.mxu0 0.0
    %125 = vmatpush1.msra.mxu0 0.0
    %126 = vmatprep.subr.mxu0 0.0
    %127 = vmatpush1.msra.mxu0 0.0
    %128 = vmatprep.subr.mxu0 0.0
    %129 = vmatpush1.msra.mxu0 0.0
    %130 = vmatprep.subr.mxu0 0.0
    %131 = vmatpush1.msra.mxu0 0.0
    %132 = vmatprep.subr.mxu0 0.0
    %133 = vmatpush1.msra.mxu0 0.0
    %134 = vmatprep.subr.mxu0 0.0
    %135 = vmatpush1.msra.mxu0 0.0
    %136 = vmatprep.subr.mxu0 0.0
    %137 = vmatpush1.msra.mxu0 0.0
    %138 = vmatprep.subr.mxu0 0.0
    %139 = vmatpush1.msra.mxu0 0.0
    %140 = vmatprep.subr.mxu0 0.0
    %141 = vmatpush1.msra.mxu0 0.0
    %142 = vmatprep.subr.mxu0 0.0
    %143 = vmatpush1.msra.mxu0 0.0
    %144 = vmatprep.mubr.f32.mxu0 0.0
    %145 = vmatmul.mubr.f32.gmra.mrb[0].mxu0 %v47
    %v146 = vpop.f32.mrb[0].mxu0
    %v147 = vadd.f32 0.0, %v146
    %v148 = vpop.f32.mrb[0].mxu0
    %v149 = vadd.f32 0.0, %v148
    %150 = vdwg.mxu0
    %vm151 = vcmask 130048
    %v153 = vsel %vm151, %v42, 0
    %155 = vmatprep.subr.mxu0 %v44
    %156 = vmatpush1.msra.mxu0 %v43
    %157 = vmatprep.subr.mxu0 %v46
    %158 = vmatpush1.msra.mxu0 %v45
    %159 = vmatprep.subr.mxu0 0.0
    %160 = vmatpush1.msra.mxu0 0.0
    %161 = vmatprep.subr.mxu0 0.0
    %162 = vmatpush1.msra.mxu0 0.0
    %163 = vmatprep.subr.mxu0 0.0
    %164 = vmatpush1.msra.mxu0 0.0
    %165 = vmatprep.subr.mxu0 0.0
    %166 = vmatpush1.msra.mxu0 0.0
    %167 = vmatprep.subr.mxu0 0.0
    %168 = vmatpush1.msra.mxu0 0.0
    %169 = vmatprep.subr.mxu0 0.0
    %170 = vmatpush1.msra.mxu0 0.0
    %171 = vmatprep.subr.mxu0 0.0
    %172 = vmatpush1.msra.mxu0 0.0
    %173 = vmatprep.subr.mxu0 0.0
    %174 = vmatpush1.msra.mxu0 0.0
    %175 = vmatprep.subr.mxu0 0.0
    %176 = vmatpush1.msra.mxu0 0.0
    %177 = vmatprep.subr.mxu0 0.0
    %178 = vmatpush1.msra.mxu0 0.0
    %179 = vmatprep.subr.mxu0 0.0
    %180 = vmatpush1.msra.mxu0 0.0
    %181 = vmatprep.subr.mxu0 0.0
    %182 = vmatpush1.msra.mxu0 0.0
    %183 = vmatprep.subr.mxu0 0.0
    %184 = vmatpush1.msra.mxu0 0.0
    %185 = vmatprep.subr.mxu0 0.0
    %186 = vmatpush1.msra.mxu0 0.0
    %187 = vmatprep.subr.mxu0 0.0
    %188 = vmatpush1.msra.mxu0 0.0
    %189 = vmatprep.subr.mxu0 0.0
    %190 = vmatpush1.msra.mxu0 0.0
    %191 = vmatprep.subr.mxu0 0.0
    %192 = vmatpush1.msra.mxu0 0.0
    %193 = vmatprep.subr.mxu0 0.0
    %194 = vmatpush1.msra.mxu0 0.0
    %195 = vmatprep.subr.mxu0 0.0
    %196 = vmatpush1.msra.mxu0 0.0
    %197 = vmatprep.subr.mxu0 0.0
    %198 = vmatpush1.msra.mxu0 0.0
    %199 = vmatprep.subr.mxu0 0.0
    %200 = vmatpush1.msra.mxu0 0.0
    %201 = vmatprep.subr.mxu0 0.0
    %202 = vmatpush1.msra.mxu0 0.0
    %203 = vmatprep.subr.mxu0 0.0
    %204 = vmatpush1.msra.mxu0 0.0
    %205 = vmatprep.subr.mxu0 0.0
    %206 = vmatpush1.msra.mxu0 0.0
    %207 = vmatprep.subr.mxu0 0.0
    %208 = vmatpush1.msra.mxu0 0.0
    %209 = vmatprep.subr.mxu0 0.0
    %210 = vmatpush1.msra.mxu0 0.0
    %211 = vmatprep.subr.mxu0 0.0
    %212 = vmatpush1.msra.mxu0 0.0
    %213 = vmatprep.subr.mxu0 0.0
    %214 = vmatpush1.msra.mxu0 0.0
    %215 = vmatprep.subr.mxu0 0.0
    %216 = vmatpush1.msra.mxu0 0.0
    %217 = vmatprep.subr.mxu0 0.0
    %218 = vmatpush1.msra.mxu0 0.0
    %219 = vmatprep.mubr.f32.mxu0 0.0
    %220 = vmatmul.mubr.f32.gmra.mrb[0].mxu0 %v153
    %v221 = vpop.f32.mrb[0].mxu0
    %v222 = vadd.f32 %v147, %v221
    %v223 = vpop.f32.mrb[0].mxu0
    %v224 = vadd.f32 %v149, %v223
    %225 = vdwg.mxu0
    %v226 = vld [vmem:[%s4] sm:$0x3]
    %v228 = vlaneseq
    %v229 = vshrl.u32 %v228, 7
    %v230 = vsub.s32 0, %v229
    %v231 = vrot.slane %v226, %v230
    %v232 = vlaneseq
    %v233 = vshrl.u32 %v232, 7
    %v234 = vsub.s32 1, %v233
    %v235 = vrot.slane %v226, %v234
    %v238 = vadd.f32 %v222, %v231
    %v239 = vadd.f32 %v224, %v235
    %v240 = vmax.f32 %v238, 0.0
    %241 = vmax.xlane.f32.xlu0 %v239
    %v242 = vpop.xlane.xlu0 %241
    %v243 = vsub.f32 %v239, %v242
    %v244 = vmul.f32 %v243, 1.442695
    %v245 = vpow.pop %v244
    %246 = vadd.xlane.f32.xlu0 %v245
    %v247 = vpop.xlane.xlu0 %246
    %v248 = vlog2.pop %v247
    %v249 = vmul.f32 %v248, 0.6931472
    %250 = vst [vmem:[%s6] sm:$0xff] %v240
    %v251 = vsub.f32 %v243, %v249
    %252 = vst [vmem:[%s5] sm:$0xff] %v251
    // Predicated region
    $region30: #{rnn_forward.1} parent=1 // pred_check
      _
    $region31: #{rnn_forward.1} parent=1 // pred_check_branch
      %254 = sbr.rel (0) target = $region33
    $region32: #{rnn_forward.1} parent=1 // pred_region
      _
    $region33: #{rnn_forward.1} parent=1 // pred_fallthru
      _
    // Predicated region
    $region34: #{rnn_forward.1} parent=1 // pred_check
      _
    $region35: #{rnn_forward.1} parent=1 // pred_check_branch
      %256 = sbr.rel (0) target = $region37
    $region36: #{rnn_forward.1} parent=1 // pred_region
      _
    $region37: #{rnn_forward.1} parent=1 // pred_fallthru
      _
    // Predicated region
    $region38: #{rnn_forward.1} parent=1 // pred_check
      _
    $region39: #{rnn_forward.1} parent=1 // pred_check_branch
      %258 = sbr.rel (0) target = $region41
    $region40: #{rnn_forward.1} parent=1 // pred_region
      _
    $region41: #{rnn_forward.1} parent=1 // pred_fallthru
      _
    // Predicated region
    $region42: #{rnn_forward.1} parent=1 // pred_check
      _
    $region43: #{rnn_forward.1} parent=1 // pred_check_branch
      %260 = sbr.rel (0) target = $region45
    $region44: #{rnn_forward.1} parent=1 // pred_region
      _
    $region45: #{rnn_forward.1} parent=1 // pred_fallthru
      _
    %261 = vsyncpa [#allocation3], 1

</llo_original>
